<compile_context>
chip_gen: v5e
topology: v5e:2x2
jax: 0.10.0
libtpu: 0.0.40
codegen_flags: <defaults>
</compile_context>

<pallas_src>
import functools

import jax
import jax.numpy as jnp
from jax.experimental import pallas as pl
from jax.experimental.pallas import tpu as pltpu


def _huber_kernel(pred_ref, tgt_ref, out_ref, *, delta, valid_rows,
                  steps_per_part, group_rows, needs_mask):
    """Fold one (tile_rows, cols) tile of Huber values into a (1, group_rows, cols) accumulator."""
    k = pl.program_id(1)

    @pl.when(k == 0)
    def _init():
        out_ref[...] = jnp.zeros_like(out_ref)

    tile_rows, cols = pred_ref.shape

    # Stream native dtype from HBM; do the cancellation-sensitive subtraction
    # and the accumulation in f32 (the VPU cast is free vs. the memory bound).
    err = pred_ref[...].astype(jnp.float32) - tgt_ref[...].astype(jnp.float32)
    abs_err = jnp.abs(err)
    quad = 0.5 * err * err
    lin = delta * abs_err - 0.5 * (delta * delta)
    huber = jnp.where(abs_err <= delta, quad, lin)

    if needs_mask:
        # Rows past the end of the array (partial / clamped boundary blocks)
        # contain unspecified data: select 0 for them (where, not multiply, so
        # garbage NaN/Inf cannot leak into the sum).
        block_row = pl.program_id(0) * steps_per_part + k
        row_ids = block_row * tile_rows + jax.lax.broadcasted_iota(
            jnp.int32, (tile_rows, cols), 0)
        huber = jnp.where(row_ids < valid_rows, huber, 0.0)

    # Reduce the tile over row-groups of `group_rows` with plain vector adds
    # (no cross-lane movement); accumulate into the resident output block.
    num_groups = tile_rows // group_rows
    out_ref[...] += jnp.sum(
        huber.reshape(num_groups, group_rows, cols), axis=0, keepdims=True)


def huber_loss(pred, target, delta=1.0, *, block_rows=1024, num_partitions=2):
    """Pallas implementation of HuberLoss.forward (mean reduction)."""
    assert pred.shape == target.shape, (pred.shape, target.shape)
    n = int(pred.size)
    assert n > 0

    # Lane-dense column width that divides n exactly -> the 2-D view is a free
    # (bitcast) reshape, no extra HBM traffic.  Fall back to a zero-pad only
    # when n is not a multiple of 128 (zeros contribute exactly 0 to the sum).
    cols = None
    for c in (512, 256, 128):
        if n % c == 0:
            cols = c
            break
    p = pred.reshape(-1)
    t = target.reshape(-1)
    if cols is None:
        cols = 512
        pad = (-n) % cols
        p = jnp.pad(p, (0, pad))
        t = jnp.pad(t, (0, pad))
    rows = p.size // cols
    p = p.reshape(rows, cols)
    t = t.reshape(rows, cols)

    # Row tile: multiple of sublane packing (8 for 32-bit, 16 for 16-bit dtypes).
    align = 16 if (p.dtype.itemsize < 4 or t.dtype.itemsize < 4) else 8
    if rows >= align:
        wanted = max(align, (int(block_rows) // align) * align)
        tile_rows = min(wanted, (rows // align) * align)
    else:
        tile_rows = rows
    group_rows = 8 if tile_rows % 8 == 0 else tile_rows

    num_row_blocks = pl.cdiv(rows, tile_rows)
    parts = max(1, min(int(num_partitions), num_row_blocks))      # v7x: 2 TCs
    steps_per_part = pl.cdiv(num_row_blocks, parts)
    needs_mask = (parts * steps_per_part * tile_rows) != rows

    kernel = functools.partial(
        _huber_kernel, delta=float(delta), valid_rows=rows,
        steps_per_part=steps_per_part, group_rows=group_rows,
        needs_mask=needs_mask)

    in_spec = pl.BlockSpec((tile_rows, cols),
                           lambda pi, k: (pi * steps_per_part + k, 0))

    # VMEM guard: 2 inputs x 2 pipeline buffers x tile, plus headroom.
    tile_bytes = tile_rows * cols * (p.dtype.itemsize + t.dtype.itemsize)
    vmem_limit = int(min(48 << 20, max(16 << 20, 3 * tile_bytes + (2 << 20))))

    out = pl.pallas_call(
        kernel,
        out_shape=jax.ShapeDtypeStruct((parts, group_rows, cols), jnp.float32),
        grid=(parts, steps_per_part),
        in_specs=[in_spec, in_spec],
        out_specs=pl.BlockSpec((1, group_rows, cols), lambda pi, k: (pi, 0, 0)),
        compiler_params=pltpu.CompilerParams(
            dimension_semantics=("parallel", "arbitrary"),
            vmem_limit_bytes=vmem_limit,
        ),
        cost_estimate=pl.CostEstimate(
            flops=7 * n,
            transcendentals=0,
            bytes_accessed=int(p.size) * p.dtype.itemsize
            + int(t.size) * t.dtype.itemsize
            + parts * group_rows * cols * 4),
    )(p, t)

    # Tiny epilogue: reduce a few KiB of partial sums and apply the mean scale.
    return jnp.sum(out) * (1.0 / float(n))


def _reference(pred, target, delta):
    """Pure-JAX reference mirroring the PyTorch module."""
    err = pred.astype(jnp.float32) - target.astype(jnp.float32)
    abs_err = jnp.abs(err)
    quad = 0.5 * err * err
    lin = delta * abs_err - 0.5 * delta * delta
    return jnp.mean(jnp.where(abs_err <= delta, quad, lin))


if __name__ == "__main__":
    key = jax.random.PRNGKey(0)
    k1, k2, k3, k4 = jax.random.split(key, 4)

    # Case 1: small aligned f32 batch (single tile, rows < 8).
    pred1 = 2.0 * jax.random.normal(k1, (8, 256), jnp.float32)
    tgt1 = jax.random.normal(k2, (8, 256), jnp.float32)
    out1 = jax.block_until_ready(huber_loss(pred1, tgt1, delta=1.0))
    ref1 = _reference(pred1, tgt1, 1.0)
    assert out1.shape == (), out1.shape
    assert jnp.allclose(out1, ref1, rtol=1e-5, atol=1e-5), (out1, ref1)

    # Case 2: multi-step grid + 2-way partitioned (parallel) row axis.
    pred2 = 1.5 * jax.random.normal(k3, (32, 512), jnp.float32)
    tgt2 = jax.random.normal(k4, (32, 512), jnp.float32)
    out2 = jax.block_until_ready(huber_loss(pred2, tgt2, delta=1.0, block_rows=8))
    ref2 = _reference(pred2, tgt2, 1.0)
    assert jnp.allclose(out2, ref2, rtol=1e-5, atol=1e-5), (out2, ref2)

    # Case 3: ragged shape requiring the zero-pad fallback, non-default delta.
    pred3 = 3.0 * jax.random.normal(k1, (7, 100), jnp.float32)
    tgt3 = jax.random.normal(k2, (7, 100), jnp.float32)
    out3 = jax.block_until_ready(huber_loss(pred3, tgt3, delta=0.75))
    ref3 = _reference(pred3, tgt3, 0.75)
    assert jnp.allclose(out3, ref3, rtol=1e-5, atol=1e-5), (out3, ref3)

    # Case 4: bf16 inputs streamed natively, upcast inside the kernel.
    pred4 = (2.0 * jax.random.normal(k3, (16, 512), jnp.float32)).astype(jnp.bfloat16)
    tgt4 = jax.random.normal(k4, (16, 512), jnp.float32).astype(jnp.bfloat16)
    out4 = jax.block_until_ready(huber_loss(pred4, tgt4, delta=1.0))
    ref4 = _reference(pred4, tgt4, 1.0)
    assert jnp.allclose(out4, ref4, rtol=1e-5, atol=1e-5), (out4, ref4)

    print("KERNEL_OK")
</pallas_src>

<mosaic_0001>
module attributes {stable_mosaic.version = 11 : i64} {
  func.func @_huber_kernel(%arg0: i32, %arg1: i32, %arg2: memref<4x512xf32, #tpu.memory_space<vmem>>, %arg3: memref<4x512xf32, #tpu.memory_space<vmem>>, %arg4: memref<1x4x512xf32, #tpu.memory_space<vmem>>) attributes {dimension_semantics = [#tpu.dimension_semantics<parallel>, #tpu.dimension_semantics<arbitrary>], iteration_bounds = array<i64: 1, 1>, scalar_prefetch = 0 : i64, scratch_operands = 0 : i64, tpu.core_type = #tpu.core_type<tc>, window_params = [{transform_indices = @transform_0, window_bounds = array<i64: 4, 512>}, {transform_indices = @transform_1, window_bounds = array<i64: 4, 512>}, {transform_indices = @transform_2, window_bounds = array<i64: 1, 4, 512>}]} {
    %c0_i32 = arith.constant 0 : i32
    %0 = arith.cmpi eq, %arg1, %c0_i32 : i32
    %1 = arith.extui %0 : i1 to i32
    %c0_i32_0 = arith.constant 0 : i32
    %2 = arith.cmpi ne, %1, %c0_i32_0 : i32
    scf.if %2 {
      %cst_14 = arith.constant 0.000000e+00 : f32
      %23 = vector.broadcast %cst_14 : f32 to vector<1x4x512xf32>
      %c0_15 = arith.constant 0 : index
      %c0_16 = arith.constant 0 : index
      %c0_17 = arith.constant 0 : index
      %24 = vector.load %arg4[%c0_15, %c0_16, %c0_17] : memref<1x4x512xf32, #tpu.memory_space<vmem>>, vector<1x4x512xf32>
      tpu.vector_store %arg4[%c0_15, %c0_16, %c0_17], %23 {strides = array<i32>} : memref<1x4x512xf32, #tpu.memory_space<vmem>>, vector<1x4x512xf32>,
    } else {
    }
    %c0 = arith.constant 0 : index
    %c0_1 = arith.constant 0 : index
    %3 = vector.load %arg2[%c0, %c0_1] : memref<4x512xf32, #tpu.memory_space<vmem>>, vector<4x512xf32>
    %c0_2 = arith.constant 0 : index
    %c0_3 = arith.constant 0 : index
    %4 = vector.load %arg3[%c0_2, %c0_3] : memref<4x512xf32, #tpu.memory_space<vmem>>, vector<4x512xf32>
    %5 = arith.subf %3, %4 : vector<4x512xf32>
    %6 = math.absf %5 : vector<4x512xf32>
    %cst = arith.constant 5.000000e-01 : f32
    %7 = vector.broadcast %cst : f32 to vector<4x512xf32>
    %8 = arith.mulf %7, %5 : vector<4x512xf32>
    %9 = arith.mulf %8, %5 : vector<4x512xf32>
    %cst_4 = arith.constant 1.000000e+00 : f32
    %10 = vector.broadcast %cst_4 : f32 to vector<4x512xf32>
    %11 = arith.mulf %10, %6 : vector<4x512xf32>
    %cst_5 = arith.constant 5.000000e-01 : f32
    %12 = vector.broadcast %cst_5 : f32 to vector<4x512xf32>
    %13 = arith.subf %11, %12 : vector<4x512xf32>
    %cst_6 = arith.constant 1.000000e+00 : f32
    %14 = vector.broadcast %cst_6 : f32 to vector<4x512xf32>
    %15 = arith.cmpf ole, %6, %14 : vector<4x512xf32>
    %16 = arith.select %15, %9, %13 : vector<4x512xi1>, vector<4x512xf32>
    %c0_7 = arith.constant 0 : index
    %c0_8 = arith.constant 0 : index
    %c0_9 = arith.constant 0 : index
    %17 = vector.load %arg4[%c0_7, %c0_8, %c0_9] : memref<1x4x512xf32, #tpu.memory_space<vmem>>, vector<1x4x512xf32>
    %18 = vector.shape_cast %16 : vector<4x512xf32> to vector<1x4x512xf32>
    %cst_10 = arith.constant dense<0.000000e+00> : vector<4x512xf32>
    %19 = vector.multi_reduction <add>, %18, %cst_10 [0] : vector<1x4x512xf32> to vector<4x512xf32>
    %20 = vector.shape_cast %19 : vector<4x512xf32> to vector<1x4x512xf32>
    %21 = arith.addf %17, %20 : vector<1x4x512xf32>
    %c0_11 = arith.constant 0 : index
    %c0_12 = arith.constant 0 : index
    %c0_13 = arith.constant 0 : index
    %22 = vector.load %arg4[%c0_11, %c0_12, %c0_13] : memref<1x4x512xf32, #tpu.memory_space<vmem>>, vector<1x4x512xf32>
    tpu.vector_store %arg4[%c0_11, %c0_12, %c0_13], %21 {strides = array<i32>} : memref<1x4x512xf32, #tpu.memory_space<vmem>>, vector<1x4x512xf32>,
    return
  }
  func.func @transform_0(%arg0: i32, %arg1: i32) -> (i32, i32) {
    %c1_i32 = arith.constant 1 : i32
    %0 = arith.muli %arg0, %c1_i32 : i32
    %1 = arith.addi %0, %arg1 : i32
    %c0_i32 = arith.constant 0 : i32
    %c0_i32_0 = arith.constant 0 : i32
    return %1, %c0_i32 : i32, i32
  }
  func.func @transform_1(%arg0: i32, %arg1: i32) -> (i32, i32) {
    %c1_i32 = arith.constant 1 : i32
    %0 = arith.muli %arg0, %c1_i32 : i32
    %1 = arith.addi %0, %arg1 : i32
    %c0_i32 = arith.constant 0 : i32
    %c0_i32_0 = arith.constant 0 : i32
    return %1, %c0_i32 : i32, i32
  }
  func.func @transform_2(%arg0: i32, %arg1: i32) -> (i32, i32, i32) {
    %c0_i32 = arith.constant 0 : i32
    %c0_i32_0 = arith.constant 0 : i32
    %c0_i32_1 = arith.constant 0 : i32
    return %arg0, %c0_i32, %c0_i32_0 : i32, i32, i32
  }
}

</mosaic_0001>

<llo_original>
// kernel: tpu_custom_call.1
$region0: #{tpu_custom_call.1}
  #allocation0 [shape = 'u32[]', space=smem, size = 0x4, offset = 0x4, fixed_abs, tag = 'smem constant byte address 0x4 - core index']
  #allocation1 [shape = 'u32[72,128]{1,0:T(1,128)}', space=vmem, size = 0x9000, scoped, tag = 'internal scratch']
  %s0 = inlined_call_operand.hbm [shape: f32[4,512], index: 0, kind: input, shape index: {}]
  %s1 = inlined_call_operand.hbm [shape: f32[4,512], index: 1, kind: input, shape index: {}]
  %s2 = inlined_call_operand.hbm [shape: f32[1,4,512], index: 2, kind: output, shape index: {}]
  %s3 = sld [smem:[#allocation0]]
  $region30: #{tpu_custom_call.1} parent=0
    _
  %s5 = ssub.s32 1, %s3
  %s6 = scalar_select 0, %s5, %s3
  $region1: #{tpu_custom_call.1} parent=0
    #allocation2 [shape = 'u8[8192]{0}', space=vmem, size = 0x2000, scoped, tag = 'input window, operand 0, single buffered']
    #allocation3 [shape = 's32[1]{0}', space=sflag, size = 0x4, scoped, tag = 'scoped memory for tpu_custom_call.1']
    #allocation4 [shape = 's32[1]{0}', space=sflag, size = 0x4, scoped, tag = 'scoped memory for tpu_custom_call.1']
    #allocation5 [shape = 'u8[8192]{0}', space=vmem, size = 0x2000, scoped, tag = 'input window, operand 1, single buffered']
    #allocation6 [shape = 's32[1]{0}', space=sflag, size = 0x4, scoped, tag = 'scoped memory for tpu_custom_call.1']
    #allocation7 [shape = 'u8[8192]{0}', space=vmem, size = 0x2000, scoped, tag = 'output window, operand 0, single buffered']
    %7 = vsyncpa [#allocation3], 0
    %8 = vsyncpa [#allocation6], 0
    %9 = vsyncpa [#allocation4], 0
    // Predicated region
    $region2: #{tpu_custom_call.1} parent=1 // pred_check
      _
    $region3: #{tpu_custom_call.1} parent=1 // pred_check_branch
      %11 = sbr.rel (0) target = $region5
    $region4: #{tpu_custom_call.1} parent=1 // pred_region
      %s12 = sadd.s32 0, 0
      %14 = vsyncadd [#allocation3], 0
      %s15 = smul.addr %s12, 4
      %s16 = smul.addr %s15, 4
      %s17 = scalar_lea.hbm %s0, %s16
      %s19 = sshll.u32 %s17, 4
      %s20 = int_to_ptr.hbm [resolvable:$true] %s19
      %s21 = sshll.u32 [#allocation2], 4
      %s22 = int_to_ptr.vmem [resolvable:$true] %s21
      %24 = dma.hbm_to_vmem [thread:$0]  %s20, 256, %s22, [#allocation3]
    $region5: #{tpu_custom_call.1} parent=1 // pred_fallthru
      _
    // Predicated region
    $region6: #{tpu_custom_call.1} parent=1 // pred_check
      _
    $region7: #{tpu_custom_call.1} parent=1 // pred_check_branch
      %26 = sbr.rel (0) target = $region9
    $region8: #{tpu_custom_call.1} parent=1 // pred_region
      %s27 = sadd.s32 0, 0
      %29 = vsyncadd [#allocation6], 0
      %s30 = smul.addr %s27, 4
      %s31 = smul.addr %s30, 4
      %s32 = scalar_lea.hbm %s1, %s31
      %s34 = sshll.u32 %s32, 4
      %s35 = int_to_ptr.hbm [resolvable:$true] %s34
      %s36 = sshll.u32 [#allocation5], 4
      %s37 = int_to_ptr.vmem [resolvable:$true] %s36
      %39 = dma.hbm_to_vmem [thread:$0]  %s35, 256, %s37, [#allocation6]
    $region9: #{tpu_custom_call.1} parent=1 // pred_fallthru
      _
    // Predicated region
    $region10: #{tpu_custom_call.1} parent=1 // pred_check
      _
    $region11: #{tpu_custom_call.1} parent=1 // pred_check_branch
      %41 = sbr.rel (0) target = $region13
    $region12: #{tpu_custom_call.1} parent=1 // pred_region
      %43 = dma.done [#allocation3], 256
    $region13: #{tpu_custom_call.1} parent=1 // pred_fallthru
      _
    // Predicated region
    $region14: #{tpu_custom_call.1} parent=1 // pred_check
      _
    $region15: #{tpu_custom_call.1} parent=1 // pred_check_branch
      %45 = sbr.rel (0) target = $region17
    $region16: #{tpu_custom_call.1} parent=1 // pred_region
      %47 = dma.done [#allocation6], 256
    $region17: #{tpu_custom_call.1} parent=1 // pred_fallthru
      _
    %s48 = sadd.s32 0, 0
    %s49 = sadd.s32 0, 0
    %p50 = scmp.eq.s32.totalorder 0, 0
    // Predicated region
    $region18: #{tpu_custom_call.1} parent=1 // pred_check
      %p51 = pneg %p50
    $region19: #{tpu_custom_call.1} parent=1 // pred_check_branch
      %53 = sbr.rel (%p51) target = $region21
    $region20: #{tpu_custom_call.1} parent=1 // pred_region
      %54 = vst [vmem:[#allocation7] sm:$0xff] 0.0
      %55 = vst [vmem:[#allocation7 + $0x8] sm:$0xff] 0.0
    $region21: #{tpu_custom_call.1} parent=1 // pred_fallthru
      _
    %v56 = vld [vmem:[#allocation2] sm:$0xff]
    %v57 = vld [vmem:[#allocation2 + $0x8] sm:$0xff]
    %v58 = vld [vmem:[#allocation5] sm:$0xff]
    %v59 = vld [vmem:[#allocation5 + $0x8] sm:$0xff]
    %v60 = vsub.f32 %v56, %v58
    %v61 = vsub.f32 %v57, %v59
    %v62 = vand.u32 2147483647, %v60
    %v63 = vand.u32 2147483647, %v61
    %v64 = vmul.f32 %v60, 0.5
    %v65 = vmul.f32 %v61, 0.5
    %v66 = vmul.f32 %v64, %v60
    %v67 = vmul.f32 %v65, %v61
    %v68 = vsub.f32 %v62, 0.5
    %v69 = vsub.f32 %v63, 0.5
    %vm70 = vcmp.le.f32.partialorder %v62, 1.0
    %vm71 = vcmp.le.f32.partialorder %v63, 1.0
    %v72 = vsel %vm70, %v66, %v68
    %v73 = vsel %vm71, %v67, %v69
    %v74 = vld [vmem:[#allocation7] sm:$0xff]
    %v75 = vld [vmem:[#allocation7 + $0x8] sm:$0xff]
    %v76 = vadd.f32 %v72, 0.0
    %v77 = vadd.f32 %v73, 0.0
    %v78 = vadd.f32 %v74, %v76
    %v79 = vadd.f32 %v75, %v77
    %80 = vst [vmem:[#allocation7] sm:$0xff] %v78
    %81 = vst [vmem:[#allocation7 + $0x8] sm:$0xff] %v79
    // Predicated region
    $region22: #{tpu_custom_call.1} parent=1 // pred_check
      _
    $region23: #{tpu_custom_call.1} parent=1 // pred_check_branch
      %83 = sbr.rel (0) target = $region25
    $region24: #{tpu_custom_call.1} parent=1 // pred_region
      %85 = vsyncadd [#allocation4], 0
      %s87 = sshll.u32 [#allocation7], 4
      %s88 = int_to_ptr.vmem [resolvable:$true] %s87
      %s89 = sshll.u32 %s2, 4
      %s90 = int_to_ptr.hbm [resolvable:$true] %s89
      %92 = dma.vmem_to_hbm [thread:$0]  %s88, 256, %s90, [#allocation4]
    $region25: #{tpu_custom_call.1} parent=1 // pred_fallthru
      _
    // Predicated region
    $region26: #{tpu_custom_call.1} parent=1 // pred_check
      _
    $region27: #{tpu_custom_call.1} parent=1 // pred_check_branch
      %94 = sbr.rel (0) target = $region29
    $region28: #{tpu_custom_call.1} parent=1 // pred_region
      %96 = dma.done [#allocation4], 256
    $region29: #{tpu_custom_call.1} parent=1 // pred_fallthru
      _
    %97 = vsyncpa [#allocation3], 1
    %98 = vsyncpa [#allocation6], 1
    %99 = vsyncpa [#allocation4], 1

</llo_original>
